<compile_context>
chip_gen: v7x
topology: tpu7x:2x2x1
jax: 0.10.0
libtpu: 0.0.40
codegen_flags: <defaults>
</compile_context>

<pallas_src>
import functools

import jax
import jax.numpy as jnp
from jax import lax
from jax.experimental import pallas as pl
from jax.experimental.pallas import tpu as pltpu

F = 128       # features (lane dim, multiple of 128)
EPS = 1e-6
_M31 = 0x7FFFFFFF


def _hash31(idx, sd):
    """Stateless Wang-style 31-bit hash. int32 only; values kept non-negative
    before every shift so arithmetic >> == logical >>."""
    m31 = jnp.int32(_M31)
    h = (idx * jnp.int32(0x0019660D) + sd) & m31
    h = (((h >> 16) ^ h) * jnp.int32(0x045D9F3B)) & m31
    h = (((h >> 16) ^ h) * jnp.int32(0x045D9F3B)) & m31
    h = ((h >> 16) ^ h) & m31
    return h


def _residual_kernel(seed_ref, x_ref, alpha_ref, beta_ref, w_ref, b_ref,
                     o_ref, *, p):
    tm, f = x_ref.shape
    x = x_ref[...].astype(jnp.float32)

    # ---- LayerNormalization (PyTorch module semantics) ----
    mean = jnp.mean(x, axis=-1, keepdims=True)
    xc = x - mean
    var = jnp.sum(xc * xc, axis=-1, keepdims=True) * (1.0 / (f - 1))  # unbiased
    inv = 1.0 / (jnp.sqrt(var) + EPS)            # (tm, 1): cheap per-row divide
    normed = (xc * inv) * alpha_ref[...] + beta_ref[...]

    # ---- sublayer: dense projection on the MXU (bf16 operands, f32 acc) ----
    y = jnp.dot(normed.astype(jnp.bfloat16), w_ref[...],
                preferred_element_type=jnp.float32)
    y = y + b_ref[...]

    # ---- Dropout (inverted, train-mode); integer-domain keep test ----
    if p > 0.0:
        row0 = pl.program_id(0) * tm
        rows = lax.broadcasted_iota(jnp.int32, (tm, f), 0) + row0
        cols = lax.broadcasted_iota(jnp.int32, (tm, f), 1)
        idx = rows * jnp.int32(f) + cols          # global element index
        sd = seed_ref[0] * jnp.int32(0x3C6EF35F)
        h = _hash31(idx, sd)
        thresh = jnp.int32(min(int(p * 2147483648.0), _M31))
        keep = h >= thresh                        # P(keep) = 1 - p
        y = jnp.where(keep, y * (1.0 / (1.0 - p)), 0.0)

    # ---- residual add ----
    o_ref[...] = (x + y).astype(o_ref.dtype)


def _pick_tm(m):
    # Largest row tile (multiple of 8, up to 1024) that divides M.
    for tm in (1024, 512, 256, 128, 64, 32, 16, 8):
        if m % tm == 0:
            return tm
    raise ValueError(f"B*S={m} must be a multiple of 8")


def residual_connection(x, alpha, beta, w, b, *, dropout_p=0.1, seed=0):
    """x: (B, S, F). Returns x + dropout(linear(layernorm(x)))."""
    B, S, feat = x.shape
    assert feat == F
    M = B * S
    tm = _pick_tm(M)
    x2d = x.reshape(M, F)

    kernel = functools.partial(_residual_kernel, p=float(dropout_p))

    out2d = pl.pallas_call(
        kernel,
        out_shape=jax.ShapeDtypeStruct((M, F), x.dtype),
        grid_spec=pltpu.PrefetchScalarGridSpec(
            num_scalar_prefetch=1,                 # seed lands in SMEM
            grid=(M // tm,),
            in_specs=[
                pl.BlockSpec((tm, F), lambda i, seed: (i, 0)),   # x
                pl.BlockSpec((1, F), lambda i, seed: (0, 0)),    # alpha
                pl.BlockSpec((1, F), lambda i, seed: (0, 0)),    # beta
                pl.BlockSpec((F, F), lambda i, seed: (0, 0)),    # W (bf16)
                pl.BlockSpec((1, F), lambda i, seed: (0, 0)),    # b
            ],
            out_specs=pl.BlockSpec((tm, F), lambda i, seed: (i, 0)),
        ),
        compiler_params=pltpu.CompilerParams(
            dimension_semantics=("parallel",)),    # rows independent -> megacore
    )(
        jnp.array([seed], dtype=jnp.int32),
        x2d,
        alpha.reshape(1, F).astype(jnp.float32),
        beta.reshape(1, F).astype(jnp.float32),
        w.astype(jnp.bfloat16),
        b.reshape(1, F).astype(jnp.float32),
    )
    return out2d.reshape(B, S, F)


if __name__ == "__main__":
    key = jax.random.PRNGKey(0)
    kx, kw, kb = jax.random.split(key, 3)

    B, S = 2, 8
    x = jax.random.normal(kx, (B, S, F), dtype=jnp.float32)

    # Deterministic parameter init (mirrors module __init__ shapes):
    alpha = jnp.ones((F,), jnp.float32)             # LayerNormalization.alpha
    beta = jnp.zeros((F,), jnp.float32)             # LayerNormalization.bias
    W = jax.random.normal(kw, (F, F), jnp.float32) / jnp.sqrt(F)  # sublayer
    b = 0.01 * jax.random.normal(kb, (F,), jnp.float32)

    out = residual_connection(x, alpha, beta, W, b, dropout_p=0.1, seed=0)
    out = jax.block_until_ready(out)
    assert out.shape == x.shape and out.dtype == x.dtype
    assert bool(jnp.all(jnp.isfinite(out)))
    print("KERNEL_OK")
</pallas_src>

<mosaic_0001>
module attributes {stable_mosaic.version = 11 : i64} {
  func.func @_residual_kernel(%arg0: i32, %arg1: memref<1xi32, #tpu.memory_space<smem>>, %arg2: memref<16x128xf32, #tpu.memory_space<vmem>>, %arg3: memref<1x128xf32, #tpu.memory_space<vmem>>, %arg4: memref<1x128xf32, #tpu.memory_space<vmem>>, %arg5: memref<128x128xbf16, #tpu.memory_space<vmem>>, %arg6: memref<1x128xf32, #tpu.memory_space<vmem>>, %arg7: memref<16x128xf32, #tpu.memory_space<vmem>>) attributes {dimension_semantics = [#tpu.dimension_semantics<parallel>], iteration_bounds = array<i64: 1>, scalar_prefetch = 1 : i64, scratch_operands = 0 : i64, tpu.core_type = #tpu.core_type<tc>, window_params = [{transform_indices = @transform_0, window_bounds = array<i64: 16, 128>}, {pipeline_mode = #tpu.pipeline_mode<synchronous>, transform_indices = @transform_1, window_bounds = array<i64: 1, 128>}, {pipeline_mode = #tpu.pipeline_mode<synchronous>, transform_indices = @transform_2, window_bounds = array<i64: 1, 128>}, {pipeline_mode = #tpu.pipeline_mode<synchronous>, transform_indices = @transform_3, window_bounds = array<i64: 128, 128>}, {pipeline_mode = #tpu.pipeline_mode<synchronous>, transform_indices = @transform_4, window_bounds = array<i64: 1, 128>}, {transform_indices = @transform_5, window_bounds = array<i64: 16, 128>}]} {
    %c0 = arith.constant 0 : index
    %c0_0 = arith.constant 0 : index
    %0 = vector.load %arg2[%c0, %c0_0] : memref<16x128xf32, #tpu.memory_space<vmem>>, vector<16x128xf32>
    %cst = arith.constant dense<0.000000e+00> : vector<16xf32>
    %1 = vector.multi_reduction <add>, %0, %cst [1] : vector<16x128xf32> to vector<16xf32>
    %2 = vector.shape_cast %1 : vector<16xf32> to vector<16x1xf32>
    %cst_1 = arith.constant 1.280000e+02 : f32
    %3 = vector.broadcast %cst_1 : f32 to vector<16x1xf32>
    %4 = arith.divf %2, %3 : vector<16x1xf32>
    %5 = vector.broadcast %4 : vector<16x1xf32> to vector<16x128xf32>
    %6 = arith.subf %0, %5 : vector<16x128xf32>
    %7 = arith.mulf %6, %6 : vector<16x128xf32>
    %cst_2 = arith.constant dense<0.000000e+00> : vector<16xf32>
    %8 = vector.multi_reduction <add>, %7, %cst_2 [1] : vector<16x128xf32> to vector<16xf32>
    %9 = vector.shape_cast %8 : vector<16xf32> to vector<16x1xf32>
    %cst_3 = arith.constant 0.00787401571 : f32
    %10 = vector.broadcast %cst_3 : f32 to vector<16x1xf32>
    %11 = arith.mulf %9, %10 : vector<16x1xf32>
    %12 = math.sqrt %11 : vector<16x1xf32>
    %cst_4 = arith.constant 9.99999997E-7 : f32
    %13 = vector.broadcast %cst_4 : f32 to vector<16x1xf32>
    %14 = arith.addf %12, %13 : vector<16x1xf32>
    %cst_5 = arith.constant 1.000000e+00 : f32
    %15 = vector.broadcast %cst_5 : f32 to vector<16x1xf32>
    %16 = arith.divf %15, %14 : vector<16x1xf32>
    %17 = vector.broadcast %16 : vector<16x1xf32> to vector<16x128xf32>
    %18 = arith.mulf %6, %17 : vector<16x128xf32>
    %c0_6 = arith.constant 0 : index
    %c0_7 = arith.constant 0 : index
    %19 = vector.load %arg3[%c0_6, %c0_7] : memref<1x128xf32, #tpu.memory_space<vmem>>, vector<1x128xf32>
    %20 = vector.broadcast %19 : vector<1x128xf32> to vector<16x128xf32>
    %21 = arith.mulf %18, %20 : vector<16x128xf32>
    %c0_8 = arith.constant 0 : index
    %c0_9 = arith.constant 0 : index
    %22 = vector.load %arg4[%c0_8, %c0_9] : memref<1x128xf32, #tpu.memory_space<vmem>>, vector<1x128xf32>
    %23 = vector.broadcast %22 : vector<1x128xf32> to vector<16x128xf32>
    %24 = arith.addf %21, %23 : vector<16x128xf32>
    %25 = arith.truncf %24 : vector<16x128xf32> to vector<16x128xbf16>
    %c0_10 = arith.constant 0 : index
    %c0_11 = arith.constant 0 : index
    %26 = vector.load %arg5[%c0_10, %c0_11] : memref<128x128xbf16, #tpu.memory_space<vmem>>, vector<128x128xbf16>
    %cst_12 = arith.constant dense<0.000000e+00> : vector<16x128xf32>
    %27 = tpu.matmul %25, %26, %cst_12 {dimension_numbers = #tpu.dot_dimension_numbers<[1], [0], [0], [1], [0, 0, 1, 1], [], []>} : vector<16x128xbf16>, vector<128x128xbf16>, vector<16x128xf32> -> vector<16x128xf32>
    %c0_13 = arith.constant 0 : index
    %c0_14 = arith.constant 0 : index
    %28 = vector.load %arg6[%c0_13, %c0_14] : memref<1x128xf32, #tpu.memory_space<vmem>>, vector<1x128xf32>
    %29 = vector.broadcast %28 : vector<1x128xf32> to vector<16x128xf32>
    %30 = arith.addf %27, %29 : vector<16x128xf32>
    %c16_i32 = arith.constant 16 : i32
    %31 = arith.muli %arg0, %c16_i32 : i32
    %32 = tpu.iota {dimensions = array<i32: 0>} : vector<16x128xi32>
    %33 = vector.broadcast %31 : i32 to vector<16x128xi32>
    %34 = arith.addi %32, %33 : vector<16x128xi32>
    %35 = tpu.iota {dimensions = array<i32: 1>} : vector<16x128xi32>
    %c128_i32 = arith.constant 128 : i32
    %36 = vector.broadcast %c128_i32 : i32 to vector<16x128xi32>
    %37 = arith.muli %34, %36 : vector<16x128xi32>
    %38 = arith.addi %37, %35 : vector<16x128xi32>
    %c0_15 = arith.constant 0 : index
    %39 = memref.load %arg1[%c0_15] : memref<1xi32, #tpu.memory_space<smem>>
    %c1013904223_i32 = arith.constant 1013904223 : i32
    %40 = arith.muli %39, %c1013904223_i32 : i32
    %c1664525_i32 = arith.constant 1664525 : i32
    %41 = vector.broadcast %c1664525_i32 : i32 to vector<16x128xi32>
    %42 = arith.muli %38, %41 : vector<16x128xi32>
    %43 = vector.broadcast %40 : i32 to vector<16x128xi32>
    %44 = arith.addi %42, %43 : vector<16x128xi32>
    %c2147483647_i32 = arith.constant 2147483647 : i32
    %45 = vector.broadcast %c2147483647_i32 : i32 to vector<16x128xi32>
    %46 = arith.andi %44, %45 : vector<16x128xi32>
    %c16_i32_16 = arith.constant 16 : i32
    %47 = vector.broadcast %c16_i32_16 : i32 to vector<16x128xi32>
    %48 = arith.shrsi %46, %47 : vector<16x128xi32>
    %49 = arith.xori %48, %46 : vector<16x128xi32>
    %c73244475_i32 = arith.constant 73244475 : i32
    %50 = vector.broadcast %c73244475_i32 : i32 to vector<16x128xi32>
    %51 = arith.muli %49, %50 : vector<16x128xi32>
    %c2147483647_i32_17 = arith.constant 2147483647 : i32
    %52 = vector.broadcast %c2147483647_i32_17 : i32 to vector<16x128xi32>
    %53 = arith.andi %51, %52 : vector<16x128xi32>
    %c16_i32_18 = arith.constant 16 : i32
    %54 = vector.broadcast %c16_i32_18 : i32 to vector<16x128xi32>
    %55 = arith.shrsi %53, %54 : vector<16x128xi32>
    %56 = arith.xori %55, %53 : vector<16x128xi32>
    %c73244475_i32_19 = arith.constant 73244475 : i32
    %57 = vector.broadcast %c73244475_i32_19 : i32 to vector<16x128xi32>
    %58 = arith.muli %56, %57 : vector<16x128xi32>
    %c2147483647_i32_20 = arith.constant 2147483647 : i32
    %59 = vector.broadcast %c2147483647_i32_20 : i32 to vector<16x128xi32>
    %60 = arith.andi %58, %59 : vector<16x128xi32>
    %c16_i32_21 = arith.constant 16 : i32
    %61 = vector.broadcast %c16_i32_21 : i32 to vector<16x128xi32>
    %62 = arith.shrsi %60, %61 : vector<16x128xi32>
    %63 = arith.xori %62, %60 : vector<16x128xi32>
    %c2147483647_i32_22 = arith.constant 2147483647 : i32
    %64 = vector.broadcast %c2147483647_i32_22 : i32 to vector<16x128xi32>
    %65 = arith.andi %63, %64 : vector<16x128xi32>
    %c214748364_i32 = arith.constant 214748364 : i32
    %66 = vector.broadcast %c214748364_i32 : i32 to vector<16x128xi32>
    %67 = arith.cmpi sge, %65, %66 : vector<16x128xi32>
    %cst_23 = arith.constant 1.11111116 : f32
    %68 = vector.broadcast %cst_23 : f32 to vector<16x128xf32>
    %69 = arith.mulf %30, %68 : vector<16x128xf32>
    %cst_24 = arith.constant 0.000000e+00 : f32
    %70 = vector.broadcast %cst_24 : f32 to vector<16x128xf32>
    %71 = arith.select %67, %69, %70 : vector<16x128xi1>, vector<16x128xf32>
    %72 = arith.addf %0, %71 : vector<16x128xf32>
    %c0_25 = arith.constant 0 : index
    %c0_26 = arith.constant 0 : index
    %73 = vector.load %arg7[%c0_25, %c0_26] : memref<16x128xf32, #tpu.memory_space<vmem>>, vector<16x128xf32>
    tpu.vector_store %arg7[%c0_25, %c0_26], %72 {strides = array<i32>} : memref<16x128xf32, #tpu.memory_space<vmem>>, vector<16x128xf32>,
    return
  }
  func.func @transform_0(%arg0: i32, %arg1: memref<1xi32, #tpu.memory_space<smem>>) -> (i32, i32) {
    %c0_i32 = arith.constant 0 : i32
    %c0_i32_0 = arith.constant 0 : i32
    return %arg0, %c0_i32 : i32, i32
  }
  func.func @transform_1(%arg0: i32, %arg1: memref<1xi32, #tpu.memory_space<smem>>) -> (i32, i32) {
    %c0_i32 = arith.constant 0 : i32
    %c0_i32_0 = arith.constant 0 : i32
    %c0_i32_1 = arith.constant 0 : i32
    return %c0_i32, %c0_i32_0 : i32, i32
  }
  func.func @transform_2(%arg0: i32, %arg1: memref<1xi32, #tpu.memory_space<smem>>) -> (i32, i32) {
    %c0_i32 = arith.constant 0 : i32
    %c0_i32_0 = arith.constant 0 : i32
    %c0_i32_1 = arith.constant 0 : i32
    return %c0_i32, %c0_i32_0 : i32, i32
  }
  func.func @transform_3(%arg0: i32, %arg1: memref<1xi32, #tpu.memory_space<smem>>) -> (i32, i32) {
    %c0_i32 = arith.constant 0 : i32
    %c0_i32_0 = arith.constant 0 : i32
    %c0_i32_1 = arith.constant 0 : i32
    return %c0_i32, %c0_i32_0 : i32, i32
  }
  func.func @transform_4(%arg0: i32, %arg1: memref<1xi32, #tpu.memory_space<smem>>) -> (i32, i32) {
    %c0_i32 = arith.constant 0 : i32
    %c0_i32_0 = arith.constant 0 : i32
    %c0_i32_1 = arith.constant 0 : i32
    return %c0_i32, %c0_i32_0 : i32, i32
  }
  func.func @transform_5(%arg0: i32, %arg1: memref<1xi32, #tpu.memory_space<smem>>) -> (i32, i32) {
    %c0_i32 = arith.constant 0 : i32
    %c0_i32_0 = arith.constant 0 : i32
    return %arg0, %c0_i32 : i32, i32
  }
}

</mosaic_0001>

<llo_original>
// kernel: tpu_custom_call.1
$region0: #{tpu_custom_call.1}
  #allocation0 [shape = 'u32[]', space=smem, size = 0x4, offset = 0x4, fixed_abs, tag = 'smem constant byte address 0x4 - core index']
  #allocation1 [shape = 'u32[144,128]{1,0:T(1,128)}', space=vmem, size = 0x12000, scoped, tag = 'internal scratch']
  #allocation2 [shape = 's32[1]{0}', space=sflag, size = 0x4, scoped, tag = 'scoped memory for tpu_custom_call.1']
  #allocation3 [shape = 's32[1]{0:T(128)S(6)}', space=smem, size = 0x200, scoped, tag = 'prefetched SMEM operand 0']
  %s0 = inlined_call_operand.<no memory space> [shape: s32[1], index: 0, kind: input, shape index: {}]
  %s1 = inlined_call_operand.hbm [shape: f32[16,128], index: 1, kind: input, shape index: {}]
  %s2 = inlined_call_operand.vmem [shape: f32[1,128], index: 2, kind: input, shape index: {}]
  %s3 = inlined_call_operand.vmem [shape: f32[1,128], index: 3, kind: input, shape index: {}]
  %s4 = inlined_call_operand.hbm [shape: bf16[128,128], index: 4, kind: input, shape index: {}]
  %s5 = inlined_call_operand.vmem [shape: f32[1,128], index: 5, kind: input, shape index: {}]
  %s6 = inlined_call_operand.hbm [shape: f32[16,128], index: 6, kind: output, shape index: {}]
  %s7 = sld [smem:[#allocation0]]
  $region38: #{tpu_custom_call.1} parent=0
    _
  %s9 = ssub.s32 1, %s7
  %s10 = scalar_select 0, %s9, %s7
  %11 = sst [smem:[#allocation3]] %s0
  $region1: #{tpu_custom_call.1} parent=0
    #allocation4 [shape = 'u8[8192]{0}', space=vmem, size = 0x2000, scoped, tag = 'input window, operand 1, single buffered']
    #allocation5 [shape = 's32[1]{0}', space=sflag, size = 0x4, scoped, tag = 'scoped memory for tpu_custom_call.1']
    #allocation6 [shape = 's32[1]{0}', space=sflag, size = 0x4, scoped, tag = 'scoped memory for tpu_custom_call.1']
    #allocation7 [shape = 'u8[32768]{0}', space=vmem, size = 0x8000, scoped, tag = 'input window, operand 4, single buffered']
    #allocation8 [shape = 's32[1]{0}', space=sflag, size = 0x4, scoped, tag = 'scoped memory for tpu_custom_call.1']
    #allocation9 [shape = 'u8[8192]{0}', space=vmem, size = 0x2000, scoped, tag = 'output window, operand 0, single buffered']
    %12 = vsyncpa [#allocation5], 0
    %13 = vsyncpa [#allocation8], 0
    %14 = vsyncpa [#allocation6], 0
    // Predicated region
    $region2: #{tpu_custom_call.1} parent=1 // pred_check
      _
    $region3: #{tpu_custom_call.1} parent=1 // pred_check_branch
      %16 = sbr.rel (0) target = $region5
    $region4: #{tpu_custom_call.1} parent=1 // pred_region
      %s18 = ssub.s32 256, 256
      %19 = vsyncadd [#allocation5], %s18
      %s20 = sshll.u32 [#allocation4], 4
      %s21 = int_to_ptr.vmem [resolvable:$true] %s20
      %26 = dma.hbm_to_vmem [thread:$0]  %s1, 256, %s21, [#allocation5], 128, 128, 8
    $region5: #{tpu_custom_call.1} parent=1 // pred_fallthru
      _
    // Predicated region
    $region6: #{tpu_custom_call.1} parent=1 // pred_check
      _
    $region7: #{tpu_custom_call.1} parent=1 // pred_check_branch
      %28 = sbr.rel (0) target = $region9
    $region8: #{tpu_custom_call.1} parent=1 // pred_region
      _
    $region9: #{tpu_custom_call.1} parent=1 // pred_fallthru
      _
    // Predicated region
    $region10: #{tpu_custom_call.1} parent=1 // pred_check
      _
    $region11: #{tpu_custom_call.1} parent=1 // pred_check_branch
      %30 = sbr.rel (0) target = $region13
    $region12: #{tpu_custom_call.1} parent=1 // pred_region
      _
    $region13: #{tpu_custom_call.1} parent=1 // pred_fallthru
      _
    // Predicated region
    $region14: #{tpu_custom_call.1} parent=1 // pred_check
      _
    $region15: #{tpu_custom_call.1} parent=1 // pred_check_branch
      %32 = sbr.rel (0) target = $region17
    $region16: #{tpu_custom_call.1} parent=1 // pred_region
      %s34 = ssub.s32 1024, 1024
      %35 = vsyncadd [#allocation8], %s34
      %s36 = sshll.u32 [#allocation7], 4
      %s37 = int_to_ptr.vmem [resolvable:$true] %s36
      %42 = dma.hbm_to_vmem [thread:$0]  %s4, 1024, %s37, [#allocation8], 64, 64, 4
    $region17: #{tpu_custom_call.1} parent=1 // pred_fallthru
      _
    // Predicated region
    $region18: #{tpu_custom_call.1} parent=1 // pred_check
      _
    $region19: #{tpu_custom_call.1} parent=1 // pred_check_branch
      %44 = sbr.rel (0) target = $region21
    $region20: #{tpu_custom_call.1} parent=1 // pred_region
      _
    $region21: #{tpu_custom_call.1} parent=1 // pred_fallthru
      _
    // Predicated region
    $region22: #{tpu_custom_call.1} parent=1 // pred_check
      _
    $region23: #{tpu_custom_call.1} parent=1 // pred_check_branch
      %46 = sbr.rel (0) target = $region25
    $region24: #{tpu_custom_call.1} parent=1 // pred_region
      %47 = dma.done [#allocation5], 256
    $region25: #{tpu_custom_call.1} parent=1 // pred_fallthru
      _
    // Predicated region
    $region26: #{tpu_custom_call.1} parent=1 // pred_check
      _
    $region27: #{tpu_custom_call.1} parent=1 // pred_check_branch
      %49 = sbr.rel (0) target = $region29
    $region28: #{tpu_custom_call.1} parent=1 // pred_region
      %50 = dma.done [#allocation8], 1024
    $region29: #{tpu_custom_call.1} parent=1 // pred_fallthru
      _
    %v52 = vld [vmem:[#allocation4] sm:$0xff]
    %v53 = vld [vmem:[#allocation4 + $0x8] sm:$0xff]
    %54 = vadd.xlane.f32.xlu0 %v52
    %v55 = vpop.xlane.xlu0 %54
    %56 = vadd.xlane.f32.xlu0 %v53
    %v57 = vpop.xlane.xlu0 %56
    %v58 = vrcp.pop 128.0
    %v59 = vmul.f32 %v55, %v58
    %v60 = vmul.f32 %v57, %v58
    %v61 = vsub.f32 %v52, %v59
    %v62 = vsub.f32 %v53, %v60
    %v63 = vmul.f32 %v61, %v61
    %v64 = vmul.f32 %v62, %v62
    %65 = vadd.xlane.f32.xlu0 %v63
    %v66 = vpop.xlane.xlu0 %65
    %67 = vadd.xlane.f32.xlu0 %v64
    %v68 = vpop.xlane.xlu0 %67
    %v69 = vmul.f32 %v66, 0.007874016
    %v70 = vmul.f32 %v68, 0.007874016
    %v71 = vrsqrt.pop %v69
    %v72 = vmul.f32 %v69, %v71
    %vm73 = vcmp.eq.f32.partialorder %v69, inf
    %v74 = vsel %vm73, %v69, %v72
    %vm75 = vcmp.eq.f32.partialorder %v69, 0.0
    %v76 = vand.u32 %v69, 2147483648
    %v77 = vsel %vm75, %v76, %v74
    %v78 = vrsqrt.pop %v70
    %v79 = vmul.f32 %v70, %v78
    %vm80 = vcmp.eq.f32.partialorder %v70, inf
    %v81 = vsel %vm80, %v70, %v79
    %vm82 = vcmp.eq.f32.partialorder %v70, 0.0
    %v83 = vand.u32 %v70, 2147483648
    %v84 = vsel %vm82, %v83, %v81
    %v85 = vadd.f32 %v77, 1e-06
    %v86 = vadd.f32 %v84, 1e-06
    %v87 = vrcp.pop %v85
    %v88 = vmul.f32 1.0, %v87
    %v89 = vrcp.pop %v86
    %v90 = vmul.f32 1.0, %v89
    %v91 = vmul.f32 %v61, %v88
    %v92 = vmul.f32 %v62, %v90
    %v93 = vld [vmem:[%s2] sm:$0x1]
    %v95 = vlaneseq
    %v96 = vshrl.u32 %v95, 7
    %v97 = vsub.s32 0, %v96
    %v98 = vrot.slane %v93, %v97
    %v100 = vmul.f32 %v91, %v98
    %v101 = vmul.f32 %v92, %v98
    %v102 = vld [vmem:[%s3] sm:$0x1]
    %v104 = vlaneseq
    %v105 = vshrl.u32 %v104, 7
    %v106 = vsub.s32 0, %v105
    %v107 = vrot.slane %v102, %v106
    %v109 = vadd.f32 %v100, %v107
    %v110 = vadd.f32 %v101, %v107
    %v111 = vpack.c.bf16 %v110, %v109
    %v112 = vld [vmem:[#allocation7] sm:$0xf]
    %v113 = vld [vmem:[#allocation7 + $0x4] sm:$0xf]
    %v114 = vld [vmem:[#allocation7 + $0x8] sm:$0xf]
    %v115 = vld [vmem:[#allocation7 + $0xc] sm:$0xf]
    %v116 = vld [vmem:[#allocation7 + $0x10] sm:$0xf]
    %v117 = vld [vmem:[#allocation7 + $0x14] sm:$0xf]
    %v118 = vld [vmem:[#allocation7 + $0x18] sm:$0xf]
    %v119 = vld [vmem:[#allocation7 + $0x1c] sm:$0xf]
    %v120 = vld [vmem:[#allocation7 + $0x20] sm:$0xf]
    %v121 = vld [vmem:[#allocation7 + $0x24] sm:$0xf]
    %v122 = vld [vmem:[#allocation7 + $0x28] sm:$0xf]
    %v123 = vld [vmem:[#allocation7 + $0x2c] sm:$0xf]
    %v124 = vld [vmem:[#allocation7 + $0x30] sm:$0xf]
    %v125 = vld [vmem:[#allocation7 + $0x34] sm:$0xf]
    %v126 = vld [vmem:[#allocation7 + $0x38] sm:$0xf]
    %v127 = vld [vmem:[#allocation7 + $0x3c] sm:$0xf]
    %v128 = vld [vmem:[%s5] sm:$0x1]
    %v130 = vlaneseq
    %v131 = vshrl.u32 %v130, 7
    %v132 = vsub.s32 0, %v131
    %v133 = vrot.slane %v128, %v132
    %v151 = vunpack.c.l.b16 %v112
    %v152 = vunpack.c.l.b16 %v113
    %v153 = vunpack.c.l.b16 %v114
    %v154 = vunpack.c.l.b16 %v115
    %v155 = vunpack.c.l.b16 %v116
    %v156 = vunpack.c.l.b16 %v117
    %v157 = vunpack.c.l.b16 %v118
    %v158 = vunpack.c.l.b16 %v119
    %v159 = vunpack.c.l.b16 %v120
    %v160 = vunpack.c.l.b16 %v121
    %v161 = vunpack.c.l.b16 %v122
    %v162 = vunpack.c.l.b16 %v123
    %v163 = vunpack.c.l.b16 %v124
    %v164 = vunpack.c.l.b16 %v125
    %v165 = vunpack.c.l.b16 %v126
    %v166 = vunpack.c.l.b16 %v127
    %v167 = vpack.c.b16 %v152, %v151
    %v168 = vpack.c.b16 %v154, %v153
    %v169 = vpack.c.b16 %v156, %v155
    %v170 = vpack.c.b16 %v158, %v157
    %v171 = vpack.c.b16 %v160, %v159
    %v172 = vpack.c.b16 %v162, %v161
    %v173 = vpack.c.b16 %v164, %v163
    %v174 = vpack.c.b16 %v166, %v165
    %183 = vmatprep.subr.bf16.mxu0 0
    %184 = vmatpush1.bf16.msra.mxu0 %v167
    %185 = vmatprep.subr.bf16.mxu0 0
    %186 = vmatpush1.bf16.msra.mxu0 %v168
    %187 = vmatprep.subr.bf16.mxu0 0
    %188 = vmatpush1.bf16.msra.mxu0 %v169
    %189 = vmatprep.subr.bf16.mxu0 0
    %190 = vmatpush1.bf16.msra.mxu0 %v170
    %191 = vmatprep.subr.bf16.mxu0 0
    %192 = vmatpush1.bf16.msra.mxu0 %v171
    %193 = vmatprep.subr.bf16.mxu0 0
    %194 = vmatpush1.bf16.msra.mxu0 %v172
    %195 = vmatprep.subr.bf16.mxu0 0
    %196 = vmatpush1.bf16.msra.mxu0 %v173
    %197 = vmatprep.subr.bf16.mxu0 0
    %198 = vmatpush1.bf16.msra.mxu0 %v174
    %199 = vmatprep.subr.bf16.mxu0 0
    %200 = vmatpush1.bf16.msra.mxu0 0
    %201 = vmatprep.subr.bf16.mxu0 0
    %202 = vmatpush1.bf16.msra.mxu0 0
    %203 = vmatprep.subr.bf16.mxu0 0
    %204 = vmatpush1.bf16.msra.mxu0 0
    %205 = vmatprep.subr.bf16.mxu0 0
    %206 = vmatpush1.bf16.msra.mxu0 0
    %207 = vmatprep.subr.bf16.mxu0 0
    %208 = vmatpush1.bf16.msra.mxu0 0
    %209 = vmatprep.subr.bf16.mxu0 0
    %210 = vmatpush1.bf16.msra.mxu0 0
    %211 = vmatprep.subr.bf16.mxu0 0
    %212 = vmatpush1.bf16.msra.mxu0 0
    %213 = vmatprep.subr.bf16.mxu0 0
    %214 = vmatpush1.bf16.msra.mxu0 0
    %215 = vmatprep.mubr.bf16.mxu0 0
    %216 = vmatmul.mubr.bf16.gmra.mrb[0].mxu0 %v111
    %v217 = vpop.f32.mrb[0].mxu0
    %v218 = vadd.f32 %v133, %v217
    %v219 = vpop.f32.mrb[0].mxu0
    %v220 = vpop.f32.mrb[0].mxu0
    %v221 = vadd.f32 %v133, %v220
    %v222 = vpop.f32.mrb[0].mxu0
    %223 = vdwg.mxu0
    %s224 = smul.u32 0, 16
    %v225 = vlaneseq
    %v226 = vshrl.u32 %v225, 7
    %v227 = vadd.s32 %v226, 8
    %v228 = vstv %s224
    %v229 = vadd.s32 %v226, %v228
    %v230 = vadd.s32 %v227, %v228
    %v231 = vlaneseq
    %v232 = vand.u32 %v231, 127
    %v233 = vmul.u32 %v229, 128
    %v234 = vmul.u32 %v230, 128
    %v235 = vadd.s32 %v233, %v232
    %v236 = vadd.s32 %v234, %v232
    %s237 = sld [smem:[#allocation3]]
    %s238 = smul.u32 %s237, 1013904223
    %v239 = vmul.u32 %v235, 1664525
    %v240 = vmul.u32 %v236, 1664525
    %v241 = vstv %s238
    %v242 = vadd.s32 %v239, %v241
    %v243 = vadd.s32 %v240, %v241
    %v244 = vand.u32 %v242, 2147483647
    %v245 = vand.u32 %v243, 2147483647
    %v246 = vshra.s32 %v244, 16
    %v247 = vshra.s32 %v245, 16
    %v248 = vxor.u32 %v246, %v244
    %v249 = vxor.u32 %v247, %v245
    %v250 = vmul.u32 %v248, 73244475
    %v251 = vmul.u32 %v249, 73244475
    %v252 = vand.u32 %v250, 2147483647
    %v253 = vand.u32 %v251, 2147483647
    %v254 = vshra.s32 %v252, 16
    %v255 = vshra.s32 %v253, 16
    %v256 = vxor.u32 %v254, %v252
    %v257 = vxor.u32 %v255, %v253
    %v258 = vmul.u32 %v256, 73244475
    %v259 = vmul.u32 %v257, 73244475
    %v260 = vand.u32 %v258, 2147483647
    %v261 = vand.u32 %v259, 2147483647
    %v262 = vshra.s32 %v260, 16
    %v263 = vshra.s32 %v261, 16
    %v264 = vxor.u32 %v262, %v260
    %v265 = vxor.u32 %v263, %v261
    %v266 = vand.u32 %v264, 2147483647
    %v267 = vand.u32 %v265, 2147483647
    %vm268 = vcmp.ge.s32.totalorder %v266, 214748364
    %vm269 = vcmp.ge.s32.totalorder %v267, 214748364
    %v270 = vmul.f32 %v218, 1.1111112
    %v271 = vmul.f32 %v221, 1.1111112
    %v272 = vsel %vm268, %v270, 0.0
    %v273 = vsel %vm269, %v271, 0.0
    %v274 = vadd.f32 %v52, %v272
    %v275 = vadd.f32 %v53, %v273
    %276 = vst [vmem:[#allocation9] sm:$0xff] %v274
    %277 = vst [vmem:[#allocation9 + $0x8] sm:$0xff] %v275
    // Predicated region
    $region30: #{tpu_custom_call.1} parent=1 // pred_check
      _
    $region31: #{tpu_custom_call.1} parent=1 // pred_check_branch
      %279 = sbr.rel (0) target = $region33
    $region32: #{tpu_custom_call.1} parent=1 // pred_region
      %s281 = ssub.s32 256, 256
      %282 = vsyncadd [#allocation6], %s281
      %s283 = sshll.u32 [#allocation9], 4
      %s284 = int_to_ptr.vmem [resolvable:$true] %s283
      %289 = dma.vmem_to_hbm [thread:$0]  %s284, 256, %s6, [#allocation6], 128, 128, 8
    $region33: #{tpu_custom_call.1} parent=1 // pred_fallthru
      _
    // Predicated region
    $region34: #{tpu_custom_call.1} parent=1 // pred_check
      _
    $region35: #{tpu_custom_call.1} parent=1 // pred_check_branch
      %291 = sbr.rel (0) target = $region37
    $region36: #{tpu_custom_call.1} parent=1 // pred_region
      %292 = dma.done [#allocation6], 256
    $region37: #{tpu_custom_call.1} parent=1 // pred_fallthru
      _
    %293 = vsyncpa [#allocation5], 1
    %294 = vsyncpa [#allocation8], 1
    %295 = vsyncpa [#allocation6], 1

</llo_original>
